<compile_context>
chip_gen: v7x
topology: tpu7x:2x2x1
jax: 0.10.0
libtpu: 0.0.40
codegen_flags: <defaults>
</compile_context>

<pallas_src>
import functools

import numpy as np
import jax
import jax.numpy as jnp
from jax import lax
from jax.experimental import pallas as pl
from jax.experimental.pallas import tpu as pltpu


def _box3d_loss_kernel(w_ref, pred_ref, targ_ref, out_ref, acc_ref, *,
                       tm, rows, inv_n):
    i = pl.program_id(0)          # partial index ("parallel"; per-TC on 2-TC chips)
    j = pl.program_id(1)          # streaming reduction step ("arbitrary")
    inner = pl.num_programs(1)

    @pl.when(j == 0)
    def _init():
        acc_ref[...] = jnp.zeros_like(acc_ref)

    blk = i * inner + j
    # Ragged-tail handling: rows past the true extent of the lane-dense slab are
    # masked here, so the wrapper never has to pad up to a block multiple.
    local_row = lax.broadcasted_iota(jnp.int32, (tm, 128), 0)
    valid = local_row < (rows - blk * tm)

    a = pred_ref[...].astype(jnp.float32)
    b = targ_ref[...].astype(jnp.float32)
    d = jnp.where(valid, a - b, 0.0)

    # Resident weight planes: w[0] = {alpha,alpha,alpha,beta,beta,beta,0} pattern,
    # w[1] = gamma at yaw positions.  Period is 56 rows = 7 whole (8,128) tiles, so
    # the reshape below is layout-preserving and the multiply is a plain broadcast.
    w = w_ref[...]
    w_sq, w_rot = w[0], w[1]

    d3 = d.reshape(tm // 56, 56, 128)
    # pos/dim squared error and the rotation (1 - cos) term fused into one pass over
    # the main slab.  Masked / zero-padded positions have d == 0, so both terms
    # contribute exactly 0 there regardless of the weights.
    term = d3 * d3 * w_sq[None, :, :] + (1.0 - jnp.cos(d3)) * w_rot[None, :, :]
    # Per-step partial reduce to (56,128): pure vreg adds, no cross-lane work.
    acc_ref[...] += jnp.sum(term, axis=0)

    @pl.when(j == inner - 1)
    def _finalize():
        out_ref[0, 0] = jnp.sum(acc_ref[...]) * inv_n


def make_box3d_loss(alpha: float = 1.0, beta: float = 1.0, gamma: float = 0.5,
                    block_rows: int = 8176):
    """Returns (pred, target) -> scalar loss, computed by a Pallas TPU kernel.

    block_rows: lane-dense rows (of 128 lanes) per grid step.  The default (8176,
    a multiple of 56) gives ~4 MiB per input block -> ~16 MiB of double-buffered
    input VMEM, amortizing per-step overhead to a few percent on all generations.
    """
    alpha, beta, gamma = float(alpha), float(beta), float(gamma)

    # Compile-time constant weight planes (numpy -> XLA constant; nothing computed
    # on-device per call, nothing streamed from HBM per step).
    col = (np.arange(56 * 128, dtype=np.int64).reshape(56, 128)) % 7
    w_np = np.stack([
        np.where(col < 3, alpha, np.where(col < 6, beta, 0.0)),   # squared-error weights
        np.where(col == 6, gamma, 0.0),                           # 1-cos weights
    ]).astype(np.float32)

    def loss_fn(pred, target):
        assert pred.shape == target.shape
        assert pred.ndim == 2 and pred.shape[1] == 7
        n = pred.shape[0]
        total = 7 * n
        itemsize = jnp.dtype(pred.dtype).itemsize
        # Block row count must be a multiple of the dtype's sublane tiling and of 7
        # (so the per-column weight pattern is block-invariant).
        row_mult = 7 * max(8, 32 // itemsize)
        rows = pl.cdiv(total, 128)            # valid lane-dense rows

        def to_slab(x):
            # Keep native dtype (cast to f32 inside the kernel).  When 7N is a
            # multiple of 128 the reshape is a pure bitcast -> no HBM copy at all;
            # otherwise pad only to the next 128-lane row (the ragged last block is
            # masked in-kernel, never padded to a block multiple).
            flat = x.reshape(-1)
            if total % 128 != 0:
                flat = jnp.pad(flat, (0, rows * 128 - total))
            return flat.reshape(rows, 128)

        pred2d = to_slab(pred)
        targ2d = to_slab(target)

        tm_cap = max(row_mult, (int(block_rows) // row_mult) * row_mult)
        tm = min(tm_cap, pl.cdiv(rows, row_mult) * row_mult)
        nblocks = pl.cdiv(rows, tm)
        # 2-way partial split on the leading "parallel" axis (used by v7x's 2 TCs);
        # fall back to a single partial when the block count does not split evenly.
        n_par = 2 if (nblocks >= 2 and nblocks % 2 == 0) else 1
        inner = nblocks // n_par

        kernel = functools.partial(_box3d_loss_kernel,
                                   tm=tm, rows=rows, inv_n=1.0 / float(n))

        partials = pl.pallas_call(
            kernel,
            out_shape=jax.ShapeDtypeStruct((n_par, 1), jnp.float32),
            grid_spec=pltpu.PrefetchScalarGridSpec(
                num_scalar_prefetch=0,
                grid=(n_par, inner),
                in_specs=[
                    # Tiny resident weight constant: fetched once (constant index).
                    pl.BlockSpec((2, 56, 128), lambda i, j: (0, 0, 0)),
                    pl.BlockSpec((tm, 128), lambda i, j: (i * inner + j, 0)),
                    pl.BlockSpec((tm, 128), lambda i, j: (i * inner + j, 0)),
                ],
                out_specs=pl.BlockSpec((1, 1), lambda i, j: (i, 0),
                                       memory_space=pltpu.SMEM),
                scratch_shapes=[
                    pltpu.VMEM((56, 128), jnp.float32),   # partial-sum accumulator
                ],
            ),
            compiler_params=pltpu.CompilerParams(
                dimension_semantics=("parallel", "arbitrary"),
                vmem_limit_bytes=32 * 1024 * 1024),
        )(jnp.asarray(w_np), pred2d, targ2d)

        return jnp.sum(partials)

    return jax.jit(loss_fn)


def box3d_loss_ref(pred, target, alpha=1.0, beta=1.0, gamma=0.5):
    """Pure-JAX reference matching the PyTorch forward."""
    pos_error = jnp.mean(jnp.sum((pred[:, :3] - target[:, :3]) ** 2, axis=1))
    dim_error = jnp.mean(jnp.sum((pred[:, 3:6] - target[:, 3:6]) ** 2, axis=1))
    rot_error = jnp.mean(1.0 - jnp.cos(pred[:, 6] - target[:, 6]))
    return alpha * pos_error + beta * dim_error + gamma * rot_error


if __name__ == "__main__":
    key = jax.random.PRNGKey(0)
    k1, k2, k3, k4, k5, k6 = jax.random.split(key, 6)

    def check(loss_fn, pred, targ):
        got = jax.block_until_ready(loss_fn(pred, targ))
        ref = jax.block_until_ready(box3d_loss_ref(pred, targ, 1.0, 1.0, 0.5))
        assert jnp.allclose(got, ref, rtol=1e-4, atol=1e-5), (got, ref)

    # 1) Small case consistent with the module: batch of 8 boxes, 7 params each.
    pred1 = jax.random.normal(k1, (8, 7), dtype=jnp.float32)
    targ1 = jax.random.normal(k2, (8, 7), dtype=jnp.float32)
    check(make_box3d_loss(1.0, 1.0, 0.5), pred1, targ1)

    # 2) Multi-step accumulation (inner grid = 3) + ragged last block + pad path.
    pred2 = jax.random.normal(k3, (3000, 7), dtype=jnp.float32)
    targ2 = jax.random.normal(k4, (3000, 7), dtype=jnp.float32)
    check(make_box3d_loss(1.0, 1.0, 0.5, block_rows=56), pred2, targ2)

    # 3) Even block count -> 2-way "parallel" partial split + ragged last block.
    pred3 = jax.random.normal(k5, (2000, 7), dtype=jnp.float32)
    targ3 = jax.random.normal(k6, (2000, 7), dtype=jnp.float32)
    check(make_box3d_loss(1.0, 1.0, 0.5, block_rows=56), pred3, targ3)

    # 4) 7*N % 128 == 0: copy-free bitcast reshape path, single block, no masking.
    pred4 = jax.random.normal(k1, (4096, 7), dtype=jnp.float32)
    targ4 = jax.random.normal(k2, (4096, 7), dtype=jnp.float32)
    check(make_box3d_loss(1.0, 1.0, 0.5), pred4, targ4)

    print("KERNEL_OK")
</pallas_src>

<mosaic_0001>
module attributes {stable_mosaic.version = 11 : i64} {
  func.func @_box3d_loss_kernel(%arg0: i32, %arg1: i32, %arg2: memref<2x56x128xf32, #tpu.memory_space<vmem>>, %arg3: memref<56x128xf32, #tpu.memory_space<vmem>>, %arg4: memref<56x128xf32, #tpu.memory_space<vmem>>, %arg5: memref<1x1xf32, #tpu.memory_space<smem>>, %arg6: memref<56x128xf32, #tpu.memory_space<vmem>>) attributes {dimension_semantics = [#tpu.dimension_semantics<parallel>, #tpu.dimension_semantics<arbitrary>], iteration_bounds = array<i64: 1, 1>, scalar_prefetch = 0 : i64, scratch_operands = 1 : i64, tpu.core_type = #tpu.core_type<tc>, window_params = [{pipeline_mode = #tpu.pipeline_mode<synchronous>, transform_indices = @transform_0, window_bounds = array<i64: 2, 56, 128>}, {transform_indices = @transform_1, window_bounds = array<i64: 56, 128>}, {transform_indices = @transform_2, window_bounds = array<i64: 56, 128>}, {transform_indices = @transform_3, window_bounds = array<i64: 1, 1>}]} {
    %c0_i32 = arith.constant 0 : i32
    %0 = arith.cmpi eq, %arg1, %c0_i32 : i32
    %1 = arith.extui %0 : i1 to i32
    %c0_i32_0 = arith.constant 0 : i32
    %2 = arith.cmpi ne, %1, %c0_i32_0 : i32
    scf.if %2 {
      %cst_16 = arith.constant 0.000000e+00 : f32
      %37 = vector.broadcast %cst_16 : f32 to vector<56x128xf32>
      %c0_17 = arith.constant 0 : index
      %c0_18 = arith.constant 0 : index
      %38 = vector.load %arg6[%c0_17, %c0_18] : memref<56x128xf32, #tpu.memory_space<vmem>>, vector<56x128xf32>
      tpu.vector_store %arg6[%c0_17, %c0_18], %37 {strides = array<i32>} : memref<56x128xf32, #tpu.memory_space<vmem>>, vector<56x128xf32>,
    } else {
    }
    %c1_i32 = arith.constant 1 : i32
    %3 = arith.muli %arg0, %c1_i32 : i32
    %4 = arith.addi %3, %arg1 : i32
    %5 = tpu.iota {dimensions = array<i32: 0>} : vector<56x128xi32>
    %c56_i32 = arith.constant 56 : i32
    %6 = arith.muli %4, %c56_i32 : i32
    %c1_i32_1 = arith.constant 1 : i32
    %7 = arith.subi %c1_i32_1, %6 : i32
    %8 = vector.broadcast %7 : i32 to vector<56x128xi32>
    %9 = arith.cmpi slt, %5, %8 : vector<56x128xi32>
    %c0 = arith.constant 0 : index
    %c0_2 = arith.constant 0 : index
    %10 = vector.load %arg3[%c0, %c0_2] : memref<56x128xf32, #tpu.memory_space<vmem>>, vector<56x128xf32>
    %c0_3 = arith.constant 0 : index
    %c0_4 = arith.constant 0 : index
    %11 = vector.load %arg4[%c0_3, %c0_4] : memref<56x128xf32, #tpu.memory_space<vmem>>, vector<56x128xf32>
    %12 = arith.subf %10, %11 : vector<56x128xf32>
    %cst = arith.constant 0.000000e+00 : f32
    %13 = vector.broadcast %cst : f32 to vector<56x128xf32>
    %14 = arith.select %9, %12, %13 : vector<56x128xi1>, vector<56x128xf32>
    %c0_5 = arith.constant 0 : index
    %c0_6 = arith.constant 0 : index
    %c0_7 = arith.constant 0 : index
    %15 = vector.load %arg2[%c0_5, %c0_6, %c0_7] : memref<2x56x128xf32, #tpu.memory_space<vmem>>, vector<2x56x128xf32>
    %16 = vector.extract_strided_slice %15 {offsets = [0, 0, 0], sizes = [1, 56, 128], strides = [1, 1, 1]} : vector<2x56x128xf32> to vector<1x56x128xf32>
    %17 = vector.shape_cast %16 : vector<1x56x128xf32> to vector<56x128xf32>
    %18 = vector.extract_strided_slice %15 {offsets = [1, 0, 0], sizes = [1, 56, 128], strides = [1, 1, 1]} : vector<2x56x128xf32> to vector<1x56x128xf32>
    %19 = vector.shape_cast %18 : vector<1x56x128xf32> to vector<56x128xf32>
    %20 = vector.shape_cast %14 : vector<56x128xf32> to vector<1x56x128xf32>
    %21 = arith.mulf %20, %20 : vector<1x56x128xf32>
    %22 = vector.shape_cast %17 : vector<56x128xf32> to vector<1x56x128xf32>
    %23 = arith.mulf %21, %22 : vector<1x56x128xf32>
    %24 = math.cos %20 : vector<1x56x128xf32>
    %cst_8 = arith.constant 1.000000e+00 : f32
    %25 = vector.broadcast %cst_8 : f32 to vector<1x56x128xf32>
    %26 = arith.subf %25, %24 : vector<1x56x128xf32>
    %27 = vector.shape_cast %19 : vector<56x128xf32> to vector<1x56x128xf32>
    %28 = arith.mulf %26, %27 : vector<1x56x128xf32>
    %29 = arith.addf %23, %28 : vector<1x56x128xf32>
    %c0_9 = arith.constant 0 : index
    %c0_10 = arith.constant 0 : index
    %30 = vector.load %arg6[%c0_9, %c0_10] : memref<56x128xf32, #tpu.memory_space<vmem>>, vector<56x128xf32>
    %cst_11 = arith.constant dense<0.000000e+00> : vector<56x128xf32>
    %31 = vector.multi_reduction <add>, %29, %cst_11 [0] : vector<1x56x128xf32> to vector<56x128xf32>
    %32 = arith.addf %30, %31 : vector<56x128xf32>
    %c0_12 = arith.constant 0 : index
    %c0_13 = arith.constant 0 : index
    %33 = vector.load %arg6[%c0_12, %c0_13] : memref<56x128xf32, #tpu.memory_space<vmem>>, vector<56x128xf32>
    tpu.vector_store %arg6[%c0_12, %c0_13], %32 {strides = array<i32>} : memref<56x128xf32, #tpu.memory_space<vmem>>, vector<56x128xf32>,
    %c0_i32_14 = arith.constant 0 : i32
    %34 = arith.cmpi eq, %arg1, %c0_i32_14 : i32
    %35 = arith.extui %34 : i1 to i32
    %c0_i32_15 = arith.constant 0 : i32
    %36 = arith.cmpi ne, %35, %c0_i32_15 : i32
    scf.if %36 {
      %c0_16 = arith.constant 0 : index
      %c0_17 = arith.constant 0 : index
      %37 = vector.load %arg6[%c0_16, %c0_17] : memref<56x128xf32, #tpu.memory_space<vmem>>, vector<56x128xf32>
      %38 = vector.shape_cast %37 : vector<56x128xf32> to vector<1x56x128xf32>
      %cst_18 = arith.constant dense<0.000000e+00> : vector<1xf32>
      %39 = vector.multi_reduction <add>, %38, %cst_18 [1, 2] : vector<1x56x128xf32> to vector<1xf32>
      %40 = vector.shape_cast %39 : vector<1xf32> to vector<1x1x1xf32>
      %41 = vector.extract %40[0, 0, 0] : f32 from vector<1x1x1xf32>
      %cst_19 = arith.constant 1.250000e-01 : f32
      %42 = arith.mulf %41, %cst_19 : f32
      %c0_20 = arith.constant 0 : index
      %c0_21 = arith.constant 0 : index
      %43 = memref.load %arg5[%c0_20, %c0_21] : memref<1x1xf32, #tpu.memory_space<smem>>
      memref.store %42, %arg5[%c0_20, %c0_21] : memref<1x1xf32, #tpu.memory_space<smem>>
    } else {
    }
    return
  }
  func.func @transform_0(%arg0: i32, %arg1: i32) -> (i32, i32, i32) {
    %c0_i32 = arith.constant 0 : i32
    %c0_i32_0 = arith.constant 0 : i32
    %c0_i32_1 = arith.constant 0 : i32
    %c0_i32_2 = arith.constant 0 : i32
    return %c0_i32, %c0_i32_0, %c0_i32_1 : i32, i32, i32
  }
  func.func @transform_1(%arg0: i32, %arg1: i32) -> (i32, i32) {
    %c1_i32 = arith.constant 1 : i32
    %0 = arith.muli %arg0, %c1_i32 : i32
    %1 = arith.addi %0, %arg1 : i32
    %c0_i32 = arith.constant 0 : i32
    %c0_i32_0 = arith.constant 0 : i32
    return %1, %c0_i32 : i32, i32
  }
  func.func @transform_2(%arg0: i32, %arg1: i32) -> (i32, i32) {
    %c1_i32 = arith.constant 1 : i32
    %0 = arith.muli %arg0, %c1_i32 : i32
    %1 = arith.addi %0, %arg1 : i32
    %c0_i32 = arith.constant 0 : i32
    %c0_i32_0 = arith.constant 0 : i32
    return %1, %c0_i32 : i32, i32
  }
  func.func @transform_3(%arg0: i32, %arg1: i32) -> (i32, i32) {
    %c0_i32 = arith.constant 0 : i32
    %c0_i32_0 = arith.constant 0 : i32
    return %arg0, %c0_i32 : i32, i32
  }
}

</mosaic_0001>

<llo_original>
// kernel: loss_fn.1
$region0: #{loss_fn.1}
  #allocation0 [shape = 'u32[]', space=smem, size = 0x4, offset = 0x4, fixed_abs, tag = 'smem constant byte address 0x4 - core index']
  #allocation1 [shape = 'u32[144,128]{1,0:T(1,128)}', space=vmem, size = 0x12000, scoped, tag = 'internal scratch']
  #allocation2 [shape = 'f32[56,128]{1,0:T(8,128)}', space=vmem, size = 0x7000, scoped, tag = 'scratch operand']
  %s0 = inlined_call_operand.hbm [shape: f32[2,56,128], index: 0, kind: input, shape index: {}]
  %s1 = inlined_call_operand.vmem [shape: f32[1,128], index: 1, kind: input, shape index: {}]
  %s2 = inlined_call_operand.vmem [shape: f32[1,128], index: 2, kind: input, shape index: {}]
  %s3 = inlined_call_operand.hbm [shape: f32[1,1], index: 3, kind: output, shape index: {}]
  %s4 = sld [smem:[#allocation0]]
  $region34: #{loss_fn.1} parent=0
    _
  %s6 = ssub.s32 1, %s4
  %s7 = scalar_select 0, %s6, %s4
  $region1: #{loss_fn.1} parent=0
    #allocation3 [shape = 'u8[57344]{0}', space=vmem, size = 0xe000, scoped, tag = 'input window, operand 0, single buffered']
    #allocation4 [shape = 's32[1]{0}', space=sflag, size = 0x4, scoped, tag = 'scoped memory for loss_fn.1']
    #allocation5 [shape = 's32[1]{0}', space=sflag, size = 0x4, scoped, tag = 'scoped memory for loss_fn.1']
    #allocation6 [shape = 'u8[512]{0}', space=smem, size = 0x200, scoped, tag = 'output window, operand 0, single buffered']
    %8 = vsyncpa [#allocation4], 0
    %9 = vsyncpa [#allocation5], 0
    // Predicated region
    $region2: #{loss_fn.1} parent=1 // pred_check
      _
    $region3: #{loss_fn.1} parent=1 // pred_check_branch
      %11 = sbr.rel (0) target = $region5
    $region4: #{loss_fn.1} parent=1 // pred_region
      %s13 = ssub.s32 1792, 1792
      %14 = vsyncadd [#allocation4], %s13
      %s15 = sshll.u32 [#allocation3], 4
      %s16 = int_to_ptr.vmem [resolvable:$true] %s15
      %21 = dma.hbm_to_vmem [thread:$0]  %s0, 1792, %s16, [#allocation4], 128, 128, 8
    $region5: #{loss_fn.1} parent=1 // pred_fallthru
      _
    // Predicated region
    $region6: #{loss_fn.1} parent=1 // pred_check
      _
    $region7: #{loss_fn.1} parent=1 // pred_check_branch
      %23 = sbr.rel (0) target = $region9
    $region8: #{loss_fn.1} parent=1 // pred_region
      %s24 = sadd.s32 0, 0
      %s25 = smul.u32 56, %s24
      %s26 = ssub.s32 1, %s25
      %s27 = smul.u32 16, %s26
      %p28 = scmp.lt.s32.totalorder %s25, 0
      %s29 = scalar_select %p28, %s25, 0
      %s30 = scalar_lea.vmem %s1, %s29
      %s31 = sadd.s32 0, 0
      %s32 = smul.u32 56, %s31
      %s33 = ssub.s32 1, %s32
      %s34 = smul.u32 16, %s33
    $region9: #{loss_fn.1} parent=1 // pred_fallthru
      _
    // Predicated region
    $region10: #{loss_fn.1} parent=1 // pred_check
      _
    $region11: #{loss_fn.1} parent=1 // pred_check_branch
      %36 = sbr.rel (0) target = $region13
    $region12: #{loss_fn.1} parent=1 // pred_region
      %s37 = sadd.s32 0, 0
      %s38 = smul.u32 56, %s37
      %s39 = ssub.s32 1, %s38
      %s40 = smul.u32 16, %s39
      %p41 = scmp.lt.s32.totalorder %s38, 0
      %s42 = scalar_select %p41, %s38, 0
      %s43 = scalar_lea.vmem %s2, %s42
      %s44 = sadd.s32 0, 0
      %s45 = smul.u32 56, %s44
      %s46 = ssub.s32 1, %s45
      %s47 = smul.u32 16, %s46
    $region13: #{loss_fn.1} parent=1 // pred_fallthru
      _
    // Predicated region
    $region14: #{loss_fn.1} parent=1 // pred_check
      _
    $region15: #{loss_fn.1} parent=1 // pred_check_branch
      %49 = sbr.rel (0) target = $region17
    $region16: #{loss_fn.1} parent=1 // pred_region
      %50 = dma.done [#allocation4], 1792
    $region17: #{loss_fn.1} parent=1 // pred_fallthru
      _
    %s51 = sadd.s32 0, 0
    %s52 = smul.u32 56, %s51
    %s53 = ssub.s32 1, %s52
    %s54 = smul.u32 16, %s53
    %p55 = scmp.lt.s32.totalorder %s52, 0
    %s56 = scalar_select %p55, %s52, 0
    %s57 = scalar_lea.vmem %s1, %s56
    %s58 = sadd.s32 0, 0
    %s59 = smul.u32 56, %s58
    %s60 = ssub.s32 1, %s59
    %s61 = smul.u32 16, %s60
    %p62 = scmp.lt.s32.totalorder %s59, 0
    %s63 = scalar_select %p62, %s59, 0
    %s64 = scalar_lea.vmem %s2, %s63
    %s65 = sadd.s32 0, 0
    %s66 = smul.u32 56, %s65
    %s67 = ssub.s32 1, %s66
    %s68 = smul.u32 16, %s67
    %p69 = scmp.lt.s32.totalorder %s66, 0
    %s70 = scalar_select %p69, %s66, 0
    %s71 = scalar_lea.vmem %s1, %s70
    %s72 = sadd.s32 0, 0
    %s73 = smul.u32 56, %s72
    %s74 = ssub.s32 1, %s73
    %s75 = smul.u32 16, %s74
    %s76 = sadd.s32 0, 0
    %s77 = smul.u32 56, %s76
    %s78 = ssub.s32 1, %s77
    %s79 = smul.u32 16, %s78
    %p80 = scmp.lt.s32.totalorder %s77, 0
    %s81 = scalar_select %p80, %s77, 0
    %s82 = scalar_lea.vmem %s2, %s81
    %s83 = sadd.s32 0, 0
    %s84 = smul.u32 56, %s83
    %s85 = ssub.s32 1, %s84
    %s86 = smul.u32 16, %s85
    %p87 = scmp.eq.s32.totalorder 0, 0
    // Predicated region
    $region18: #{loss_fn.1} parent=1 // pred_check
      %p88 = pneg %p87
    $region19: #{loss_fn.1} parent=1 // pred_check_branch
      %90 = sbr.rel (%p88) target = $region21
    $region20: #{loss_fn.1} parent=1 // pred_region
      %91 = vst [vmem:[#allocation2] sm:$0xff] 0.0
      %92 = vst [vmem:[#allocation2 + $0x8] sm:$0xff] 0.0
      %93 = vst [vmem:[#allocation2 + $0x10] sm:$0xff] 0.0
      %94 = vst [vmem:[#allocation2 + $0x18] sm:$0xff] 0.0
      %95 = vst [vmem:[#allocation2 + $0x20] sm:$0xff] 0.0
      %96 = vst [vmem:[#allocation2 + $0x28] sm:$0xff] 0.0
      %97 = vst [vmem:[#allocation2 + $0x30] sm:$0xff] 0.0
    $region21: #{loss_fn.1} parent=1 // pred_fallthru
      _
    %s98 = sadd.s32 0, 0
    %v99 = vlaneseq
    %v100 = vshrl.u32 %v99, 7
    %v101 = vadd.s32 %v100, 8
    %v102 = vadd.s32 %v100, 16
    %v103 = vadd.s32 %v100, 24
    %v104 = vadd.s32 %v100, 32
    %v105 = vadd.s32 %v100, 40
    %v106 = vadd.s32 %v100, 48
    %s107 = smul.u32 %s98, 56
    %s108 = ssub.s32 1, %s107
    %v109 = vstv %s108
    %vm110 = vcmp.lt.s32.totalorder %v100, %v109
    %vm111 = vcmp.lt.s32.totalorder %v101, %v109
    %vm112 = vcmp.lt.s32.totalorder %v102, %v109
    %vm113 = vcmp.lt.s32.totalorder %v103, %v109
    %vm114 = vcmp.lt.s32.totalorder %v104, %v109
    %vm115 = vcmp.lt.s32.totalorder %v105, %v109
    %vm116 = vcmp.lt.s32.totalorder %v106, %v109
    %v117 = vld [vmem:[%s71] sm:$0xff]
    %v118 = vld [vmem:[%s71 + $0x8] sm:$0xff]
    %v119 = vld [vmem:[%s71 + $0x10] sm:$0xff]
    %v120 = vld [vmem:[%s71 + $0x18] sm:$0xff]
    %v121 = vld [vmem:[%s71 + $0x20] sm:$0xff]
    %v122 = vld [vmem:[%s71 + $0x28] sm:$0xff]
    %v123 = vld [vmem:[%s71 + $0x30] sm:$0xff]
    %v124 = vld [vmem:[%s82] sm:$0xff]
    %v125 = vld [vmem:[%s82 + $0x8] sm:$0xff]
    %v126 = vld [vmem:[%s82 + $0x10] sm:$0xff]
    %v127 = vld [vmem:[%s82 + $0x18] sm:$0xff]
    %v128 = vld [vmem:[%s82 + $0x20] sm:$0xff]
    %v129 = vld [vmem:[%s82 + $0x28] sm:$0xff]
    %v130 = vld [vmem:[%s82 + $0x30] sm:$0xff]
    %v131 = vsub.f32 %v117, %v124
    %v132 = vsub.f32 %v118, %v125
    %v133 = vsub.f32 %v119, %v126
    %v134 = vsub.f32 %v120, %v127
    %v135 = vsub.f32 %v121, %v128
    %v136 = vsub.f32 %v122, %v129
    %v137 = vsub.f32 %v123, %v130
    %v138 = vsel %vm110, %v131, 0.0
    %v139 = vsel %vm111, %v132, 0.0
    %v140 = vsel %vm112, %v133, 0.0
    %v141 = vsel %vm113, %v134, 0.0
    %v142 = vsel %vm114, %v135, 0.0
    %v143 = vsel %vm115, %v136, 0.0
    %v144 = vsel %vm116, %v137, 0.0
    %v145 = vld [vmem:[#allocation3] sm:$0xff]
    %v146 = vld [vmem:[#allocation3 + $0x8] sm:$0xff]
    %v147 = vld [vmem:[#allocation3 + $0x10] sm:$0xff]
    %v148 = vld [vmem:[#allocation3 + $0x18] sm:$0xff]
    %v149 = vld [vmem:[#allocation3 + $0x20] sm:$0xff]
    %v150 = vld [vmem:[#allocation3 + $0x28] sm:$0xff]
    %v151 = vld [vmem:[#allocation3 + $0x30] sm:$0xff]
    %v152 = vld [vmem:[#allocation3 + $0x38] sm:$0xff]
    %v153 = vld [vmem:[#allocation3 + $0x40] sm:$0xff]
    %v154 = vld [vmem:[#allocation3 + $0x48] sm:$0xff]
    %v155 = vld [vmem:[#allocation3 + $0x50] sm:$0xff]
    %v156 = vld [vmem:[#allocation3 + $0x58] sm:$0xff]
    %v157 = vld [vmem:[#allocation3 + $0x60] sm:$0xff]
    %v158 = vld [vmem:[#allocation3 + $0x68] sm:$0xff]
    %v159 = vmul.f32 %v138, %v138
    %v160 = vmul.f32 %v139, %v139
    %v161 = vmul.f32 %v140, %v140
    %v162 = vmul.f32 %v141, %v141
    %v163 = vmul.f32 %v142, %v142
    %v164 = vmul.f32 %v143, %v143
    %v165 = vmul.f32 %v144, %v144
    %v166 = vmul.f32 %v159, %v145
    %v167 = vmul.f32 %v160, %v146
    %v168 = vmul.f32 %v161, %v147
    %v169 = vmul.f32 %v162, %v148
    %v170 = vmul.f32 %v163, %v149
    %v171 = vmul.f32 %v164, %v150
    %v172 = vmul.f32 %v165, %v151
    %v173 = vand.u32 2147483647, %v138
    %vm174 = vcmp.le.f32.partialorder %v173, 0.7853982
    %vm175 = vcmp.lt.s32.totalorder %v138, 0
    %v176 = vand.u32 %v138, 2139095040
    %v177 = vshrl.u32 %v176, 23
    %v178 = vsub.s32 %v177, 127
    %v179 = vand.u32 2147483647, %v138
    %v180 = vand.u32 %v179, 8388607
    %v181 = vor.u32 %v180, 8388608
    %v182 = vsub.s32 0, %v181
    %v183 = vadd.s32 %v178, 1
    %vm184 = vcmp.gt.s32.totalorder %v183, 0
    %v185 = vsel %vm184, %v183, 0
    %v186 = vshrl.u32 %v185, 5
    %v187 = vand.u32 %v185, 31
    %v188 = vsub.s32 32, %v187
    %v189 = vshrl.u32 683565275, %v188
    %v190 = vshll.u32 683565275, %v187
    %v191 = vshrl.u32 2475754826, %v188
    %v192 = vor.u32 %v190, %v191
    %v193 = vshll.u32 2475754826, %v187
    %v194 = vshrl.u32 2131351028, %v188
    %v195 = vor.u32 %v193, %v194
    %v196 = vshll.u32 2131351028, %v187
    %v197 = vshrl.u32 2102212464, %v188
    %v198 = vor.u32 %v196, %v197
    %v199 = vshll.u32 2102212464, %v187
    %v200 = vshrl.u32 920167782, %v188
    %v201 = vor.u32 %v199, %v200
    %v202 = vshll.u32 920167782, %v187
    %v203 = vshrl.u32 1326507024, %v188
    %v204 = vor.u32 %v202, %v203
    %vm205 = vcmp.lt.s32.totalorder %v186, 1
    %vm206 = vcmp.lt.s32.totalorder %v186, 2
    %vm207 = vcmp.lt.s32.totalorder %v186, 3
    %vm208 = vcmp.lt.s32.totalorder %v186, 4
    %v209 = vsel %vm205, %v189, %v192
    %v210 = vsel %vm208, %v198, 2102212464
    %v211 = vsel %vm207, %v195, %v210
    %v212 = vsel %vm206, %v209, %v211
    %v213 = vsel %vm205, %v192, %v195
    %v214 = vsel %vm208, %v201, 920167782
    %v215 = vsel %vm207, %v198, %v214
    %v216 = vsel %vm206, %v213, %v215
    %v217 = vsel %vm205, %v195, %v198
    %v218 = vsel %vm208, %v204, 1326507024
    %v219 = vsel %vm207, %v201, %v218
    %v220 = vsel %vm206, %v217, %v219
    %v221 = vshll.u32 %v181, 8
    %v222 = vmul.u32.u64.compose %v221, %v220
    %v223 = vextract.low.u32 %v222
    %v224 = vextract.high.u32 %v222
    %v225 = vmul.u32.u64.compose %v221, %v216
    %v226 = vextract.low.u32 %v225
    %v227 = vextract.high.u32 %v225
    %v228 = vmul.u32 %v221, %v212
    %v229 = vadd.s32 %v224, %v226
    %vm230 = vc.u32 %v224, %v226
    %v231 = vadd.s32 %v227, 1
    %v232 = vsel %vm230, %v231, %v227
    %v233 = vadd.s32 %v228, %v232
    %v234 = vadd.s32 %v233, 536870912
    %v235 = vshrl.u32 %v234, 30
    %v236 = vshll.u32 %v235, 30
    %v237 = vsub.s32 %v233, %v236
    %vm238 = vcmp.lt.s32.totalorder %v237, 0
    %v239 = vsub.s32 0, %v237
    %v240 = vsel %vm238, %v239, %v237
    %v241 = vclz %v240
    %v242 = vsub.s32 %v241, 2
    %vm243 = vcmp.gt.s32.totalorder 0, %v242
    %v244 = vsel %vm243, 0, %v242
    %v245 = vsub.s32 32, %v244
    %v246 = vshll.u32 %v237, %v244
    %v247 = vshrl.u32 %v229, %v245
    %v248 = vor.u32 %v246, %v247
    %v249 = vsub.s32 4294967266, %v244
    %v250 = vadd.s32 %v249, 127
    %v251 = vshll.u32 %v250, 23
    %v252 = vor.u32 4788187, %v251
    %v253 = vand.u32 2147483647, %v252
    %v255 = vcvt.s32.f32 %v248
    %v256 = vmul.f32 %v255, %v253
    %v257 = vxor.u32 %v256, 2147483648
    %v258 = vsel %vm175, %v257, %v256
    %v259 = vsub.s32 4, %v235
    %v260 = vsel %vm175, %v259, %v235
    %v261 = vsel %vm174, %v138, %v258
    %v262 = vsel %vm174, 0, %v260
    %v263 = vcosq.f32.pop %v261
    %v264 = vsinq.f32.pop %v261
    %vm265 = vweird.f32 %v138
    %v266 = vand.u32 %v262, 3
    %vm267 = vcmp.lt.s32.totalorder %v266, 2
    %vm268 = vcmp.eq.s32.totalorder %v266, 0
    %v269 = vxor.u32 %v264, 2147483648
    %v270 = vsel %vm268, %v263, %v269
    %vm271 = vcmp.eq.s32.totalorder %v266, 2
    %v272 = vxor.u32 %v263, 2147483648
    %v273 = vsel %vm271, %v272, %v264
    %v274 = vsel %vm267, %v270, %v273
    %v275 = vsel %vm265, nan, %v274
    %v276 = vand.u32 2147483647, %v139
    %vm277 = vcmp.le.f32.partialorder %v276, 0.7853982
    %vm278 = vcmp.lt.s32.totalorder %v139, 0
    %v279 = vand.u32 %v139, 2139095040
    %v280 = vshrl.u32 %v279, 23
    %v281 = vsub.s32 %v280, 127
    %v282 = vand.u32 2147483647, %v139
    %v283 = vand.u32 %v282, 8388607
    %v284 = vor.u32 %v283, 8388608
    %v285 = vsub.s32 0, %v284
    %v286 = vadd.s32 %v281, 1
    %vm287 = vcmp.gt.s32.totalorder %v286, 0
    %v288 = vsel %vm287, %v286, 0
    %v289 = vshrl.u32 %v288, 5
    %v290 = vand.u32 %v288, 31
    %v291 = vsub.s32 32, %v290
    %v292 = vshrl.u32 683565275, %v291
    %v293 = vshll.u32 683565275, %v290
    %v294 = vshrl.u32 2475754826, %v291
    %v295 = vor.u32 %v293, %v294
    %v296 = vshll.u32 2475754826, %v290
    %v297 = vshrl.u32 2131351028, %v291
    %v298 = vor.u32 %v296, %v297
    %v299 = vshll.u32 2131351028, %v290
    %v300 = vshrl.u32 2102212464, %v291
    %v301 = vor.u32 %v299, %v300
    %v302 = vshll.u32 2102212464, %v290
    %v303 = vshrl.u32 920167782, %v291
    %v304 = vor.u32 %v302, %v303
    %v305 = vshll.u32 920167782, %v290
    %v306 = vshrl.u32 1326507024, %v291
    %v307 = vor.u32 %v305, %v306
    %vm308 = vcmp.lt.s32.totalorder %v289, 1
    %vm309 = vcmp.lt.s32.totalorder %v289, 2
    %vm310 = vcmp.lt.s32.totalorder %v289, 3
    %vm311 = vcmp.lt.s32.totalorder %v289, 4
    %v312 = vsel %vm308, %v292, %v295
    %v313 = vsel %vm311, %v301, 2102212464
    %v314 = vsel %vm310, %v298, %v313
    %v315 = vsel %vm309, %v312, %v314
    %v316 = vsel %vm308, %v295, %v298
    %v317 = vsel %vm311, %v304, 920167782
    %v318 = vsel %vm310, %v301, %v317
    %v319 = vsel %vm309, %v316, %v318
    %v320 = vsel %vm308, %v298, %v301
    %v321 = vsel %vm311, %v307, 1326507024
    %v322 = vsel %vm310, %v304, %v321
    %v323 = vsel %vm309, %v320, %v322
    %v324 = vshll.u32 %v284, 8
    %v325 = vmul.u32.u64.compose %v324, %v323
    %v326 = vextract.low.u32 %v325
    %v327 = vextract.high.u32 %v325
    %v328 = vmul.u32.u64.compose %v324, %v319
    %v329 = vextract.low.u32 %v328
    %v330 = vextract.high.u32 %v328
    %v331 = vmul.u32 %v324, %v315
    %v332 = vadd.s32 %v327, %v329
    %vm333 = vc.u32 %v327, %v329
    %v334 = vadd.s32 %v330, 1
    %v335 = vsel %vm333, %v334, %v330
    %v336 = vadd.s32 %v331, %v335
    %v337 = vadd.s32 %v336, 536870912
    %v338 = vshrl.u32 %v337, 30
    %v339 = vshll.u32 %v338, 30
    %v340 = vsub.s32 %v336, %v339
    %vm341 = vcmp.lt.s32.totalorder %v340, 0
    %v342 = vsub.s32 0, %v340
    %v343 = vsel %vm341, %v342, %v340
    %v344 = vclz %v343
    %v345 = vsub.s32 %v344, 2
    %vm346 = vcmp.gt.s32.totalorder 0, %v345
    %v347 = vsel %vm346, 0, %v345
    %v348 = vsub.s32 32, %v347
    %v349 = vshll.u32 %v340, %v347
    %v350 = vshrl.u32 %v332, %v348
    %v351 = vor.u32 %v349, %v350
    %v352 = vsub.s32 4294967266, %v347
    %v353 = vadd.s32 %v352, 127
    %v354 = vshll.u32 %v353, 23
    %v355 = vor.u32 4788187, %v354
    %v356 = vand.u32 2147483647, %v355
    %v358 = vcvt.s32.f32 %v351
    %v359 = vmul.f32 %v358, %v356
    %v360 = vxor.u32 %v359, 2147483648
    %v361 = vsel %vm278, %v360, %v359
    %v362 = vsub.s32 4, %v338
    %v363 = vsel %vm278, %v362, %v338
    %v364 = vsel %vm277, %v139, %v361
    %v365 = vsel %vm277, 0, %v363
    %v366 = vcosq.f32.pop %v364
    %v367 = vsinq.f32.pop %v364
    %vm368 = vweird.f32 %v139
    %v369 = vand.u32 %v365, 3
    %vm370 = vcmp.lt.s32.totalorder %v369, 2
    %vm371 = vcmp.eq.s32.totalorder %v369, 0
    %v372 = vxor.u32 %v367, 2147483648
    %v373 = vsel %vm371, %v366, %v372
    %vm374 = vcmp.eq.s32.totalorder %v369, 2
    %v375 = vxor.u32 %v366, 2147483648
    %v376 = vsel %vm374, %v375, %v367
    %v377 = vsel %vm370, %v373, %v376
    %v378 = vsel %vm368, nan, %v377
    %v379 = vand.u32 2147483647, %v140
    %vm380 = vcmp.le.f32.partialorder %v379, 0.7853982
    %vm381 = vcmp.lt.s32.totalorder %v140, 0
    %v382 = vand.u32 %v140, 2139095040
    %v383 = vshrl.u32 %v382, 23
    %v384 = vsub.s32 %v383, 127
    %v385 = vand.u32 2147483647, %v140
    %v386 = vand.u32 %v385, 8388607
    %v387 = vor.u32 %v386, 8388608
    %v388 = vsub.s32 0, %v387
    %v389 = vadd.s32 %v384, 1
    %vm390 = vcmp.gt.s32.totalorder %v389, 0
    %v391 = vsel %vm390, %v389, 0
    %v392 = vshrl.u32 %v391, 5
    %v393 = vand.u32 %v391, 31
    %v394 = vsub.s32 32, %v393
    %v395 = vshrl.u32 683565275, %v394
    %v396 = vshll.u32 683565275, %v393
    %v397 = vshrl.u32 2475754826, %v394
    %v398 = vor.u32 %v396, %v397
    %v399 = vshll.u32 2475754826, %v393
    %v400 = vshrl.u32 2131351028, %v394
    %v401 = vor.u32 %v399, %v400
    %v402 = vshll.u32 2131351028, %v393
    %v403 = vshrl.u32 2102212464, %v394
    %v404 = vor.u32 %v402, %v403
    %v405 = vshll.u32 2102212464, %v393
    %v406 = vshrl.u32 920167782, %v394
    %v407 = vor.u32 %v405, %v406
    %v408 = vshll.u32 920167782, %v393
    %v409 = vshrl.u32 1326507024, %v394
    %v410 = vor.u32 %v408, %v409
    %vm411 = vcmp.lt.s32.totalorder %v392, 1
    %vm412 = vcmp.lt.s32.totalorder %v392, 2
    %vm413 = vcmp.lt.s32.totalorder %v392, 3
    %vm414 = vcmp.lt.s32.totalorder %v392, 4
    %v415 = vsel %vm411, %v395, %v398
    %v416 = vsel %vm414, %v404, 2102212464
    %v417 = vsel %vm413, %v401, %v416
    %v418 = vsel %vm412, %v415, %v417
    %v419 = vsel %vm411, %v398, %v401
    %v420 = vsel %vm414, %v407, 920167782
    %v421 = vsel %vm413, %v404, %v420
    %v422 = vsel %vm412, %v419, %v421
    %v423 = vsel %vm411, %v401, %v404
    %v424 = vsel %vm414, %v410, 1326507024
    %v425 = vsel %vm413, %v407, %v424
    %v426 = vsel %vm412, %v423, %v425
    %v427 = vshll.u32 %v387, 8
    %v428 = vmul.u32.u64.compose %v427, %v426
    %v429 = vextract.low.u32 %v428
    %v430 = vextract.high.u32 %v428
    %v431 = vmul.u32.u64.compose %v427, %v422
    %v432 = vextract.low.u32 %v431
    %v433 = vextract.high.u32 %v431
    %v434 = vmul.u32 %v427, %v418
    %v435 = vadd.s32 %v430, %v432
    %vm436 = vc.u32 %v430, %v432
    %v437 = vadd.s32 %v433, 1
    %v438 = vsel %vm436, %v437, %v433
    %v439 = vadd.s32 %v434, %v438
    %v440 = vadd.s32 %v439, 536870912
    %v441 = vshrl.u32 %v440, 30
    %v442 = vshll.u32 %v441, 30
    %v443 = vsub.s32 %v439, %v442
    %vm444 = vcmp.lt.s32.totalorder %v443, 0
    %v445 = vsub.s32 0, %v443
    %v446 = vsel %vm444, %v445, %v443
    %v447 = vclz %v446
    %v448 = vsub.s32 %v447, 2
    %vm449 = vcmp.gt.s32.totalorder 0, %v448
    %v450 = vsel %vm449, 0, %v448
    %v451 = vsub.s32 32, %v450
    %v452 = vshll.u32 %v443, %v450
    %v453 = vshrl.u32 %v435, %v451
    %v454 = vor.u32 %v452, %v453
    %v455 = vsub.s32 4294967266, %v450
    %v456 = vadd.s32 %v455, 127
    %v457 = vshll.u32 %v456, 23
    %v458 = vor.u32 4788187, %v457
    %v459 = vand.u32 2147483647, %v458
    %v461 = vcvt.s32.f32 %v454
    %v462 = vmul.f32 %v461, %v459
    %v463 = vxor.u32 %v462, 2147483648
    %v464 = vsel %vm381, %v463, %v462
    %v465 = vsub.s32 4, %v441
    %v466 = vsel %vm381, %v465, %v441
    %v467 = vsel %vm380, %v140, %v464
    %v468 = vsel %vm380, 0, %v466
    %v469 = vcosq.f32.pop %v467
    %v470 = vsinq.f32.pop %v467
    %vm471 = vweird.f32 %v140
    %v472 = vand.u32 %v468, 3
    %vm473 = vcmp.lt.s32.totalorder %v472, 2
    %vm474 = vcmp.eq.s32.totalorder %v472, 0
    %v475 = vxor.u32 %v470, 2147483648
    %v476 = vsel %vm474, %v469, %v475
    %vm477 = vcmp.eq.s32.totalorder %v472, 2
    %v478 = vxor.u32 %v469, 2147483648
    %v479 = vsel %vm477, %v478, %v470
    %v480 = vsel %vm473, %v476, %v479
    %v481 = vsel %vm471, nan, %v480
    %v482 = vand.u32 2147483647, %v141
    %vm483 = vcmp.le.f32.partialorder %v482, 0.7853982
    %vm484 = vcmp.lt.s32.totalorder %v141, 0
    %v485 = vand.u32 %v141, 2139095040
    %v486 = vshrl.u32 %v485, 23
    %v487 = vsub.s32 %v486, 127
    %v488 = vand.u32 2147483647, %v141
    %v489 = vand.u32 %v488, 8388607
    %v490 = vor.u32 %v489, 8388608
    %v491 = vsub.s32 0, %v490
    %v492 = vadd.s32 %v487, 1
    %vm493 = vcmp.gt.s32.totalorder %v492, 0
    %v494 = vsel %vm493, %v492, 0
    %v495 = vshrl.u32 %v494, 5
    %v496 = vand.u32 %v494, 31
    %v497 = vsub.s32 32, %v496
    %v498 = vshrl.u32 683565275, %v497
    %v499 = vshll.u32 683565275, %v496
    %v500 = vshrl.u32 2475754826, %v497
    %v501 = vor.u32 %v499, %v500
    %v502 = vshll.u32 2475754826, %v496
    %v503 = vshrl.u32 2131351028, %v497
    %v504 = vor.u32 %v502, %v503
    %v505 = vshll.u32 2131351028, %v496
    %v506 = vshrl.u32 2102212464, %v497
    %v507 = vor.u32 %v505, %v506
    %v508 = vshll.u32 2102212464, %v496
    %v509 = vshrl.u32 920167782, %v497
    %v510 = vor.u32 %v508, %v509
    %v511 = vshll.u32 920167782, %v496
    %v512 = vshrl.u32 1326507024, %v497
    %v513 = vor.u32 %v511, %v512
    %vm514 = vcmp.lt.s32.totalorder %v495, 1
    %vm515 = vcmp.lt.s32.totalorder %v495, 2
    %vm516 = vcmp.lt.s32.totalorder %v495, 3
    %vm517 = vcmp.lt.s32.totalorder %v495, 4
    %v518 = vsel %vm514, %v498, %v501
    %v519 = vsel %vm517, %v507, 2102212464
    %v520 = vsel %vm516, %v504, %v519
    %v521 = vsel %vm515, %v518, %v520
    %v522 = vsel %vm514, %v501, %v504
    %v523 = vsel %vm517, %v510, 920167782
    %v524 = vsel %vm516, %v507, %v523
    %v525 = vsel %vm515, %v522, %v524
    %v526 = vsel %vm514, %v504, %v507
    %v527 = vsel %vm517, %v513, 1326507024
    %v528 = vsel %vm516, %v510, %v527
    %v529 = vsel %vm515, %v526, %v528
    %v530 = vshll.u32 %v490, 8
    %v531 = vmul.u32.u64.compose %v530, %v529
    %v532 = vextract.low.u32 %v531
    %v533 = vextract.high.u32 %v531
    %v534 = vmul.u32.u64.compose %v530, %v525
    %v535 = vextract.low.u32 %v534
    %v536 = vextract.high.u32 %v534
    %v537 = vmul.u32 %v530, %v521
    %v538 = vadd.s32 %v533, %v535
    %vm539 = vc.u32 %v533, %v535
    %v540 = vadd.s32 %v536, 1
    %v541 = vsel %vm539, %v540, %v536
    %v542 = vadd.s32 %v537, %v541
    %v543 = vadd.s32 %v542, 536870912
    %v544 = vshrl.u32 %v543, 30
    %v545 = vshll.u32 %v544, 30
    %v546 = vsub.s32 %v542, %v545
    %vm547 = vcmp.lt.s32.totalorder %v546, 0
    %v548 = vsub.s32 0, %v546
    %v549 = vsel %vm547, %v548, %v546
    %v550 = vclz %v549
    %v551 = vsub.s32 %v550, 2
    %vm552 = vcmp.gt.s32.totalorder 0, %v551
    %v553 = vsel %vm552, 0, %v551
    %v554 = vsub.s32 32, %v553
    %v555 = vshll.u32 %v546, %v553
    %v556 = vshrl.u32 %v538, %v554
    %v557 = vor.u32 %v555, %v556
    %v558 = vsub.s32 4294967266, %v553
    %v559 = vadd.s32 %v558, 127
    %v560 = vshll.u32 %v559, 23
    %v561 = vor.u32 4788187, %v560
    %v562 = vand.u32 2147483647, %v561
    %v564 = vcvt.s32.f32 %v557
    %v565 = vmul.f32 %v564, %v562
    %v566 = vxor.u32 %v565, 2147483648
    %v567 = vsel %vm484, %v566, %v565
    %v568 = vsub.s32 4, %v544
    %v569 = vsel %vm484, %v568, %v544
    %v570 = vsel %vm483, %v141, %v567
    %v571 = vsel %vm483, 0, %v569
    %v572 = vcosq.f32.pop %v570
    %v573 = vsinq.f32.pop %v570
    %vm574 = vweird.f32 %v141
    %v575 = vand.u32 %v571, 3
    %vm576 = vcmp.lt.s32.totalorder %v575, 2
    %vm577 = vcmp.eq.s32.totalorder %v575, 0
    %v578 = vxor.u32 %v573, 2147483648
    %v579 = vsel %vm577, %v572, %v578
    %vm580 = vcmp.eq.s32.totalorder %v575, 2
    %v581 = vxor.u32 %v572, 2147483648
    %v582 = vsel %vm580, %v581, %v573
    %v583 = vsel %vm576, %v579, %v582
    %v584 = vsel %vm574, nan, %v583
    %v585 = vand.u32 2147483647, %v142
    %vm586 = vcmp.le.f32.partialorder %v585, 0.7853982
    %vm587 = vcmp.lt.s32.totalorder %v142, 0
    %v588 = vand.u32 %v142, 2139095040
    %v589 = vshrl.u32 %v588, 23
    %v590 = vsub.s32 %v589, 127
    %v591 = vand.u32 2147483647, %v142
    %v592 = vand.u32 %v591, 8388607
    %v593 = vor.u32 %v592, 8388608
    %v594 = vsub.s32 0, %v593
    %v595 = vadd.s32 %v590, 1
    %vm596 = vcmp.gt.s32.totalorder %v595, 0
    %v597 = vsel %vm596, %v595, 0
    %v598 = vshrl.u32 %v597, 5
    %v599 = vand.u32 %v597, 31
    %v600 = vsub.s32 32, %v599
    %v601 = vshrl.u32 683565275, %v600
    %v602 = vshll.u32 683565275, %v599
    %v603 = vshrl.u32 2475754826, %v600
    %v604 = vor.u32 %v602, %v603
    %v605 = vshll.u32 2475754826, %v599
    %v606 = vshrl.u32 2131351028, %v600
    %v607 = vor.u32 %v605, %v606
    %v608 = vshll.u32 2131351028, %v599
    %v609 = vshrl.u32 2102212464, %v600
    %v610 = vor.u32 %v608, %v609
    %v611 = vshll.u32 2102212464, %v599
    %v612 = vshrl.u32 920167782, %v600
    %v613 = vor.u32 %v611, %v612
    %v614 = vshll.u32 920167782, %v599
    %v615 = vshrl.u32 1326507024, %v600
    %v616 = vor.u32 %v614, %v615
    %vm617 = vcmp.lt.s32.totalorder %v598, 1
    %vm618 = vcmp.lt.s32.totalorder %v598, 2
    %vm619 = vcmp.lt.s32.totalorder %v598, 3
    %vm620 = vcmp.lt.s32.totalorder %v598, 4
    %v621 = vsel %vm617, %v601, %v604
    %v622 = vsel %vm620, %v610, 2102212464
    %v623 = vsel %vm619, %v607, %v622
    %v624 = vsel %vm618, %v621, %v623
    %v625 = vsel %vm617, %v604, %v607
    %v626 = vsel %vm620, %v613, 920167782
    %v627 = vsel %vm619, %v610, %v626
    %v628 = vsel %vm618, %v625, %v627
    %v629 = vsel %vm617, %v607, %v610
    %v630 = vsel %vm620, %v616, 1326507024
    %v631 = vsel %vm619, %v613, %v630
    %v632 = vsel %vm618, %v629, %v631
    %v633 = vshll.u32 %v593, 8
    %v634 = vmul.u32.u64.compose %v633, %v632
    %v635 = vextract.low.u32 %v634
    %v636 = vextract.high.u32 %v634
    %v637 = vmul.u32.u64.compose %v633, %v628
    %v638 = vextract.low.u32 %v637
    %v639 = vextract.high.u32 %v637
    %v640 = vmul.u32 %v633, %v624
    %v641 = vadd.s32 %v636, %v638
    %vm642 = vc.u32 %v636, %v638
    %v643 = vadd.s32 %v639, 1
    %v644 = vsel %vm642, %v643, %v639
    %v645 = vadd.s32 %v640, %v644
    %v646 = vadd.s32 %v645, 536870912
    %v647 = vshrl.u32 %v646, 30
    %v648 = vshll.u32 %v647, 30
    %v649 = vsub.s32 %v645, %v648
    %vm650 = vcmp.lt.s32.totalorder %v649, 0
    %v651 = vsub.s32 0, %v649
    %v652 = vsel %vm650, %v651, %v649
    %v653 = vclz %v652
    %v654 = vsub.s32 %v653, 2
    %vm655 = vcmp.gt.s32.totalorder 0, %v654
    %v656 = vsel %vm655, 0, %v654
    %v657 = vsub.s32 32, %v656
    %v658 = vshll.u32 %v649, %v656
    %v659 = vshrl.u32 %v641, %v657
    %v660 = vor.u32 %v658, %v659
    %v661 = vsub.s32 4294967266, %v656
    %v662 = vadd.s32 %v661, 127
    %v663 = vshll.u32 %v662, 23
    %v664 = vor.u32 4788187, %v663
    %v665 = vand.u32 2147483647, %v664
    %v667 = vcvt.s32.f32 %v660
    %v668 = vmul.f32 %v667, %v665
    %v669 = vxor.u32 %v668, 2147483648
    %v670 = vsel %vm587, %v669, %v668
    %v671 = vsub.s32 4, %v647
    %v672 = vsel %vm587, %v671, %v647
    %v673 = vsel %vm586, %v142, %v670
    %v674 = vsel %vm586, 0, %v672
    %v675 = vcosq.f32.pop %v673
    %v676 = vsinq.f32.pop %v673
    %vm677 = vweird.f32 %v142
    %v678 = vand.u32 %v674, 3
    %vm679 = vcmp.lt.s32.totalorder %v678, 2
    %vm680 = vcmp.eq.s32.totalorder %v678, 0
    %v681 = vxor.u32 %v676, 2147483648
    %v682 = vsel %vm680, %v675, %v681
    %vm683 = vcmp.eq.s32.totalorder %v678, 2
    %v684 = vxor.u32 %v675, 2147483648
    %v685 = vsel %vm683, %v684, %v676
    %v686 = vsel %vm679, %v682, %v685
    %v687 = vsel %vm677, nan, %v686
    %v688 = vand.u32 2147483647, %v143
    %vm689 = vcmp.le.f32.partialorder %v688, 0.7853982
    %vm690 = vcmp.lt.s32.totalorder %v143, 0
    %v691 = vand.u32 %v143, 2139095040
    %v692 = vshrl.u32 %v691, 23
    %v693 = vsub.s32 %v692, 127
    %v694 = vand.u32 2147483647, %v143
    %v695 = vand.u32 %v694, 8388607
    %v696 = vor.u32 %v695, 8388608
    %v697 = vsub.s32 0, %v696
    %v698 = vadd.s32 %v693, 1
    %vm699 = vcmp.gt.s32.totalorder %v698, 0
    %v700 = vsel %vm699, %v698, 0
    %v701 = vshrl.u32 %v700, 5
    %v702 = vand.u32 %v700, 31
    %v703 = vsub.s32 32, %v702
    %v704 = vshrl.u32 683565275, %v703
    %v705 = vshll.u32 683565275, %v702
    %v706 = vshrl.u32 2475754826, %v703
    %v707 = vor.u32 %v705, %v706
    %v708 = vshll.u32 2475754826, %v702
    %v709 = vshrl.u32 2131351028, %v703
    %v710 = vor.u32 %v708, %v709
    %v711 = vshll.u32 2131351028, %v702
    %v712 = vshrl.u32 2102212464, %v703
    %v713 = vor.u32 %v711, %v712
    %v714 = vshll.u32 2102212464, %v702
    %v715 = vshrl.u32 920167782, %v703
    %v716 = vor.u32 %v714, %v715
    %v717 = vshll.u32 920167782, %v702
    %v718 = vshrl.u32 1326507024, %v703
    %v719 = vor.u32 %v717, %v718
    %vm720 = vcmp.lt.s32.totalorder %v701, 1
    %vm721 = vcmp.lt.s32.totalorder %v701, 2
    %vm722 = vcmp.lt.s32.totalorder %v701, 3
    %vm723 = vcmp.lt.s32.totalorder %v701, 4
    %v724 = vsel %vm720, %v704, %v707
    %v725 = vsel %vm723, %v713, 2102212464
    %v726 = vsel %vm722, %v710, %v725
    %v727 = vsel %vm721, %v724, %v726
    %v728 = vsel %vm720, %v707, %v710
    %v729 = vsel %vm723, %v716, 920167782
    %v730 = vsel %vm722, %v713, %v729
    %v731 = vsel %vm721, %v728, %v730
    %v732 = vsel %vm720, %v710, %v713
    %v733 = vsel %vm723, %v719, 1326507024
    %v734 = vsel %vm722, %v716, %v733
    %v735 = vsel %vm721, %v732, %v734
    %v736 = vshll.u32 %v696, 8
    %v737 = vmul.u32.u64.compose %v736, %v735
    %v738 = vextract.low.u32 %v737
    %v739 = vextract.high.u32 %v737
    %v740 = vmul.u32.u64.compose %v736, %v731
    %v741 = vextract.low.u32 %v740
    %v742 = vextract.high.u32 %v740
    %v743 = vmul.u32 %v736, %v727
    %v744 = vadd.s32 %v739, %v741
    %vm745 = vc.u32 %v739, %v741
    %v746 = vadd.s32 %v742, 1
    %v747 = vsel %vm745, %v746, %v742
    %v748 = vadd.s32 %v743, %v747
    %v749 = vadd.s32 %v748, 536870912
    %v750 = vshrl.u32 %v749, 30
    %v751 = vshll.u32 %v750, 30
    %v752 = vsub.s32 %v748, %v751
    %vm753 = vcmp.lt.s32.totalorder %v752, 0
    %v754 = vsub.s32 0, %v752
    %v755 = vsel %vm753, %v754, %v752
    %v756 = vclz %v755
    %v757 = vsub.s32 %v756, 2
    %vm758 = vcmp.gt.s32.totalorder 0, %v757
    %v759 = vsel %vm758, 0, %v757
    %v760 = vsub.s32 32, %v759
    %v761 = vshll.u32 %v752, %v759
    %v762 = vshrl.u32 %v744, %v760
    %v763 = vor.u32 %v761, %v762
    %v764 = vsub.s32 4294967266, %v759
    %v765 = vadd.s32 %v764, 127
    %v766 = vshll.u32 %v765, 23
    %v767 = vor.u32 4788187, %v766
    %v768 = vand.u32 2147483647, %v767
    %v770 = vcvt.s32.f32 %v763
    %v771 = vmul.f32 %v770, %v768
    %v772 = vxor.u32 %v771, 2147483648
    %v773 = vsel %vm690, %v772, %v771
    %v774 = vsub.s32 4, %v750
    %v775 = vsel %vm690, %v774, %v750
    %v776 = vsel %vm689, %v143, %v773
    %v777 = vsel %vm689, 0, %v775
    %v778 = vcosq.f32.pop %v776
    %v779 = vsinq.f32.pop %v776
    %vm780 = vweird.f32 %v143
    %v781 = vand.u32 %v777, 3
    %vm782 = vcmp.lt.s32.totalorder %v781, 2
    %vm783 = vcmp.eq.s32.totalorder %v781, 0
    %v784 = vxor.u32 %v779, 2147483648
    %v785 = vsel %vm783, %v778, %v784
    %vm786 = vcmp.eq.s32.totalorder %v781, 2
    %v787 = vxor.u32 %v778, 2147483648
    %v788 = vsel %vm786, %v787, %v779
    %v789 = vsel %vm782, %v785, %v788
    %v790 = vsel %vm780, nan, %v789
    %v791 = vand.u32 2147483647, %v144
    %vm792 = vcmp.le.f32.partialorder %v791, 0.7853982
    %vm793 = vcmp.lt.s32.totalorder %v144, 0
    %v794 = vand.u32 %v144, 2139095040
    %v795 = vshrl.u32 %v794, 23
    %v796 = vsub.s32 %v795, 127
    %v797 = vand.u32 2147483647, %v144
    %v798 = vand.u32 %v797, 8388607
    %v799 = vor.u32 %v798, 8388608
    %v800 = vsub.s32 0, %v799
    %v801 = vadd.s32 %v796, 1
    %vm802 = vcmp.gt.s32.totalorder %v801, 0
    %v803 = vsel %vm802, %v801, 0
    %v804 = vshrl.u32 %v803, 5
    %v805 = vand.u32 %v803, 31
    %v806 = vsub.s32 32, %v805
    %v807 = vshrl.u32 683565275, %v806
    %v808 = vshll.u32 683565275, %v805
    %v809 = vshrl.u32 2475754826, %v806
    %v810 = vor.u32 %v808, %v809
    %v811 = vshll.u32 2475754826, %v805
    %v812 = vshrl.u32 2131351028, %v806
    %v813 = vor.u32 %v811, %v812
    %v814 = vshll.u32 2131351028, %v805
    %v815 = vshrl.u32 2102212464, %v806
    %v816 = vor.u32 %v814, %v815
    %v817 = vshll.u32 2102212464, %v805
    %v818 = vshrl.u32 920167782, %v806
    %v819 = vor.u32 %v817, %v818
    %v820 = vshll.u32 920167782, %v805
    %v821 = vshrl.u32 1326507024, %v806
    %v822 = vor.u32 %v820, %v821
    %vm823 = vcmp.lt.s32.totalorder %v804, 1
    %vm824 = vcmp.lt.s32.totalorder %v804, 2
    %vm825 = vcmp.lt.s32.totalorder %v804, 3
    %vm826 = vcmp.lt.s32.totalorder %v804, 4
    %v827 = vsel %vm823, %v807, %v810
    %v828 = vsel %vm826, %v816, 2102212464
    %v829 = vsel %vm825, %v813, %v828
    %v830 = vsel %vm824, %v827, %v829
    %v831 = vsel %vm823, %v810, %v813
    %v832 = vsel %vm826, %v819, 920167782
    %v833 = vsel %vm825, %v816, %v832
    %v834 = vsel %vm824, %v831, %v833
    %v835 = vsel %vm823, %v813, %v816
    %v836 = vsel %vm826, %v822, 1326507024
    %v837 = vsel %vm825, %v819, %v836
    %v838 = vsel %vm824, %v835, %v837
    %v839 = vshll.u32 %v799, 8
    %v840 = vmul.u32.u64.compose %v839, %v838
    %v841 = vextract.low.u32 %v840
    %v842 = vextract.high.u32 %v840
    %v843 = vmul.u32.u64.compose %v839, %v834
    %v844 = vextract.low.u32 %v843
    %v845 = vextract.high.u32 %v843
    %v846 = vmul.u32 %v839, %v830
    %v847 = vadd.s32 %v842, %v844
    %vm848 = vc.u32 %v842, %v844
    %v849 = vadd.s32 %v845, 1
    %v850 = vsel %vm848, %v849, %v845
    %v851 = vadd.s32 %v846, %v850
    %v852 = vadd.s32 %v851, 536870912
    %v853 = vshrl.u32 %v852, 30
    %v854 = vshll.u32 %v853, 30
    %v855 = vsub.s32 %v851, %v854
    %vm856 = vcmp.lt.s32.totalorder %v855, 0
    %v857 = vsub.s32 0, %v855
    %v858 = vsel %vm856, %v857, %v855
    %v859 = vclz %v858
    %v860 = vsub.s32 %v859, 2
    %vm861 = vcmp.gt.s32.totalorder 0, %v860
    %v862 = vsel %vm861, 0, %v860
    %v863 = vsub.s32 32, %v862
    %v864 = vshll.u32 %v855, %v862
    %v865 = vshrl.u32 %v847, %v863
    %v866 = vor.u32 %v864, %v865
    %v867 = vsub.s32 4294967266, %v862
    %v868 = vadd.s32 %v867, 127
    %v869 = vshll.u32 %v868, 23
    %v870 = vor.u32 4788187, %v869
    %v871 = vand.u32 2147483647, %v870
    %v873 = vcvt.s32.f32 %v866
    %v874 = vmul.f32 %v873, %v871
    %v875 = vxor.u32 %v874, 2147483648
    %v876 = vsel %vm793, %v875, %v874
    %v877 = vsub.s32 4, %v853
    %v878 = vsel %vm793, %v877, %v853
    %v879 = vsel %vm792, %v144, %v876
    %v880 = vsel %vm792, 0, %v878
    %v881 = vcosq.f32.pop %v879
    %v882 = vsinq.f32.pop %v879
    %vm883 = vweird.f32 %v144
    %v884 = vand.u32 %v880, 3
    %vm885 = vcmp.lt.s32.totalorder %v884, 2
    %vm886 = vcmp.eq.s32.totalorder %v884, 0
    %v887 = vxor.u32 %v882, 2147483648
    %v888 = vsel %vm886, %v881, %v887
    %vm889 = vcmp.eq.s32.totalorder %v884, 2
    %v890 = vxor.u32 %v881, 2147483648
    %v891 = vsel %vm889, %v890, %v882
    %v892 = vsel %vm885, %v888, %v891
    %v893 = vsel %vm883, nan, %v892
    %v894 = vsub.f32 1.0, %v275
    %v895 = vsub.f32 1.0, %v378
    %v896 = vsub.f32 1.0, %v481
    %v897 = vsub.f32 1.0, %v584
    %v898 = vsub.f32 1.0, %v687
    %v899 = vsub.f32 1.0, %v790
    %v900 = vsub.f32 1.0, %v893
    %v901 = vmul.f32 %v894, %v152
    %v902 = vmul.f32 %v895, %v153
    %v903 = vmul.f32 %v896, %v154
    %v904 = vmul.f32 %v897, %v155
    %v905 = vmul.f32 %v898, %v156
    %v906 = vmul.f32 %v899, %v157
    %v907 = vmul.f32 %v900, %v158
    %v908 = vadd.f32 %v166, %v901
    %v909 = vadd.f32 %v167, %v902
    %v910 = vadd.f32 %v168, %v903
    %v911 = vadd.f32 %v169, %v904
    %v912 = vadd.f32 %v170, %v905
    %v913 = vadd.f32 %v171, %v906
    %v914 = vadd.f32 %v172, %v907
    %v915 = vld [vmem:[#allocation2] sm:$0xff]
    %v916 = vld [vmem:[#allocation2 + $0x8] sm:$0xff]
    %v917 = vld [vmem:[#allocation2 + $0x10] sm:$0xff]
    %v918 = vld [vmem:[#allocation2 + $0x18] sm:$0xff]
    %v919 = vld [vmem:[#allocation2 + $0x20] sm:$0xff]
    %v920 = vld [vmem:[#allocation2 + $0x28] sm:$0xff]
    %v921 = vld [vmem:[#allocation2 + $0x30] sm:$0xff]
    %v922 = vadd.f32 %v908, 0.0
    %v923 = vadd.f32 %v909, 0.0
    %v924 = vadd.f32 %v910, 0.0
    %v925 = vadd.f32 %v911, 0.0
    %v926 = vadd.f32 %v912, 0.0
    %v927 = vadd.f32 %v913, 0.0
    %v928 = vadd.f32 %v914, 0.0
    %v929 = vadd.f32 %v915, %v922
    %v930 = vadd.f32 %v916, %v923
    %v931 = vadd.f32 %v917, %v924
    %v932 = vadd.f32 %v918, %v925
    %v933 = vadd.f32 %v919, %v926
    %v934 = vadd.f32 %v920, %v927
    %v935 = vadd.f32 %v921, %v928
    %936 = vst [vmem:[#allocation2] sm:$0xff] %v929
    %937 = vst [vmem:[#allocation2 + $0x8] sm:$0xff] %v930
    %938 = vst [vmem:[#allocation2 + $0x10] sm:$0xff] %v931
    %939 = vst [vmem:[#allocation2 + $0x18] sm:$0xff] %v932
    %940 = vst [vmem:[#allocation2 + $0x20] sm:$0xff] %v933
    %941 = vst [vmem:[#allocation2 + $0x28] sm:$0xff] %v934
    %942 = vst [vmem:[#allocation2 + $0x30] sm:$0xff] %v935
    // Predicated region
    $region22: #{loss_fn.1} parent=1 // pred_check
      %p943 = pneg %p87
    $region23: #{loss_fn.1} parent=1 // pred_check_branch
      %945 = sbr.rel (%p943) target = $region25
    $region24: #{loss_fn.1} parent=1 // pred_region
      %v946 = vld [vmem:[#allocation2] sm:$0xff]
      %v947 = vld [vmem:[#allocation2 + $0x8] sm:$0xff]
      %v948 = vld [vmem:[#allocation2 + $0x10] sm:$0xff]
      %v949 = vld [vmem:[#allocation2 + $0x18] sm:$0xff]
      %v950 = vld [vmem:[#allocation2 + $0x20] sm:$0xff]
      %v951 = vld [vmem:[#allocation2 + $0x28] sm:$0xff]
      %v952 = vld [vmem:[#allocation2 + $0x30] sm:$0xff]
      %v953 = vadd.f32 %v946, %v947
      %v954 = vadd.f32 %v953, %v948
      %v955 = vadd.f32 %v954, %v949
      %v956 = vadd.f32 %v955, %v950
      %v957 = vadd.f32 %v956, %v951
      %v958 = vadd.f32 %v957, %v952
      %959 = vadd.xlane.f32.xlu0 %v958
      %v960 = vpop.xlane.xlu0 %959
      %v961 = vrot.slane %v960, 4
      %v962 = vadd.f32 %v960, %v961
      %v963 = vrot.slane %v962, 2
      %v964 = vadd.f32 %v962, %v963
      %v965 = vrot.slane %v964, 1
      %v966 = vadd.f32 %v964, %v965
      %s967 = vtos %v966
      %s968 = smul.f32 %s967, 0.125
      %s969 = scalar_lea.smem [#allocation6], 0
      %970 = sst [smem:[%s969]] %s968
    $region25: #{loss_fn.1} parent=1 // pred_fallthru
      _
    // Predicated region
    $region26: #{loss_fn.1} parent=1 // pred_check
      _
    $region27: #{loss_fn.1} parent=1 // pred_check_branch
      %972 = sbr.rel (0) target = $region29
    $region28: #{loss_fn.1} parent=1 // pred_region
      %s974 = ssub.s32 16, 16
      %975 = vsyncadd [#allocation5], %s974
      %978 = dma.smem_to_hbm [#allocation6], 16, %s3, [#allocation5]
    $region29: #{loss_fn.1} parent=1 // pred_fallthru
      _
    // Predicated region
    $region30: #{loss_fn.1} parent=1 // pred_check
      _
    $region31: #{loss_fn.1} parent=1 // pred_check_branch
      %980 = sbr.rel (0) target = $region33
    $region32: #{loss_fn.1} parent=1 // pred_region
      %981 = dma.done [#allocation5], 16
    $region33: #{loss_fn.1} parent=1 // pred_fallthru
      _
    %982 = sfence
    %983 = vsyncpa [#allocation4], 1
    %984 = vsyncpa [#allocation5], 1

</llo_original>
